<compile_context>
chip_gen: v6e
topology: v6e:2x2x1
jax: 0.10.0
libtpu: 0.0.40
codegen_flags: <defaults>
</compile_context>

<pallas_src>
import jax
import jax.numpy as jnp
from jax import lax
from jax.experimental import pallas as pl
from jax.experimental.pallas import tpu as pltpu

# ---------------- sizes (small, consistent with the module) -----------------
B = 2              # SIMSIAM.__init__ / forward use batch 2
C, IMG = 3, 16     # image_size = 16
D_IN = C * IMG * IMG          # 768  (multiple of 128 -> lane aligned)
EMBED = 32                    # encoder embedding dim (synthetic encoder)
HIDDEN = 64                   # projection_hidden_size (small stand-in for 4096)
PROJ = 16                     # projection_size (small stand-in for 256)
LANE = 128                    # TPU lane width; only output (N) dims padded to this
BN_EPS = 1e-5
NORM_EPS = 1e-12              # F.normalize eps

# rows of the packed [9, 128] f32 bias / BN-parameter slab
R_BE, R_PJ_B1, R_PJ_G, R_PJ_BT, R_PJ_B2, R_PD_B1, R_PD_G, R_PD_BT, R_PD_B2 = range(9)
N_VEC = 9

# sublane offsets of the packed [176, 128] bf16 weight slab (true-K rows, N padded)
OFF_PJ1 = 0                         # [EMBED , LANE]
OFF_PJ2 = OFF_PJ1 + EMBED           # [HIDDEN, LANE]
OFF_PD1 = OFF_PJ2 + HIDDEN          # [PROJ  , LANE]
OFF_PD2 = OFF_PD1 + PROJ            # [HIDDEN, LANE]
W_ROWS = OFF_PD2 + HIDDEN           # 176; all offsets multiples of 16 (bf16 tile aligned)


# ---------------------------- Pallas kernel ---------------------------------
def simsiam_kernel(x_ref, weT_ref, w_ref, vec_ref, out_ref):
    def vrow(i, n=LANE):                     # [1, n] broadcastable row (static slice)
        return vec_ref[i:i + 1, :n]

    # ---- encoder: Linear (bf16 operands, f32 MXU accumulate) + ReLU ----
    xb = x_ref[...].astype(jnp.bfloat16)                          # cast in-kernel
    emb = lax.dot_general(xb, weT_ref[...],                       # contract K of both
                          dimension_numbers=(((1,), (1,)), ((), ())),
                          preferred_element_type=jnp.float32)     # [B, EMBED] f32
    emb = jnp.maximum(emb + vrow(R_BE, EMBED), 0.0)

    def mlp(h, k_in, w1, b1, g, bt, w2, b2):
        # h: [B, >=k_in] f32 with the real features in the first k_in lanes.
        h1 = jnp.dot(h[:, :k_in].astype(jnp.bfloat16), w1,
                     preferred_element_type=jnp.float32) + b1     # [B, 128] f32
        # BatchNorm1d (training mode, biased batch stats), single-pass moments.
        mu = jnp.mean(h1, axis=0, keepdims=True)
        ex2 = jnp.mean(h1 * h1, axis=0, keepdims=True)
        var = jnp.maximum(ex2 - mu * mu, 0.0)                     # guard cancellation
        h1 = (h1 - mu) * lax.rsqrt(var + BN_EPS) * g + bt
        h1 = jnp.maximum(h1, 0.0)                                 # ReLU
        return jnp.dot(h1[:, :HIDDEN].astype(jnp.bfloat16), w2,
                       preferred_element_type=jnp.float32) + b2   # [B, 128] f32

    # Identity augmentations -> branch two equals branch one (detach: fwd no-op).
    proj = mlp(emb, EMBED,
               w_ref[OFF_PJ1:OFF_PJ1 + EMBED, :], vrow(R_PJ_B1),
               vrow(R_PJ_G), vrow(R_PJ_BT),
               w_ref[OFF_PJ2:OFF_PJ2 + HIDDEN, :], vrow(R_PJ_B2))   # proj_one == proj_two
    pred = mlp(proj, PROJ,
               w_ref[OFF_PD1:OFF_PD1 + PROJ, :], vrow(R_PD_B1),
               vrow(R_PD_G), vrow(R_PD_BT),
               w_ref[OFF_PD2:OFF_PD2 + HIDDEN, :], vrow(R_PD_B2))   # pred_one

    # ---- loss = mean(2 - 2 * cos(normalize(pred), normalize(proj))) ----
    # Padded lanes of pred/proj are exactly zero, so the sums are unaffected.
    pp = jnp.sum(pred * pred, axis=-1, keepdims=True)            # [B, 1]
    zz = jnp.sum(proj * proj, axis=-1, keepdims=True)
    pz = jnp.sum(pred * proj, axis=-1, keepdims=True)
    eps2 = NORM_EPS * NORM_EPS
    cos = pz * lax.rsqrt(jnp.maximum(pp, eps2) * jnp.maximum(zz, eps2))
    loss = 2.0 - 2.0 * cos                                       # [B, 1]
    out_ref[...] = jnp.mean(loss, axis=0, keepdims=True)         # [1, 1]


# ------------------------------ wrapper --------------------------------------
@jax.jit
def simsiam_forward(x_nchw, weT, w_slab, vec_slab):
    # NCHW -> [B, C*H*W] is a free row-major reshape (same as torch .view); stays
    # f32 -- the bf16 cast happens inside the kernel (one fewer XLA op / round trip).
    xf = x_nchw.reshape(x_nchw.shape[0], -1)                     # [B, 768] f32

    flops = 2 * B * (D_IN * EMBED + (EMBED + HIDDEN + PROJ + HIDDEN) * LANE)
    bytes_accessed = (xf.size * 4 + weT.size * 2 + w_slab.size * 2
                      + vec_slab.size * 4 + 4)
    vmem = pl.BlockSpec(memory_space=pltpu.MemorySpace.VMEM)

    out = pl.pallas_call(
        simsiam_kernel,
        out_shape=jax.ShapeDtypeStruct((1, 1), jnp.float32),
        in_specs=[vmem, vmem, vmem, vmem],
        out_specs=vmem,
        cost_estimate=pl.CostEstimate(flops=flops,
                                      transcendentals=2 * LANE + B,
                                      bytes_accessed=bytes_accessed),
    )(xf, weT, w_slab, vec_slab)
    return out[0, 0]


# ------------------------- deterministic params -------------------------------
def init_params(key):
    ks = jax.random.split(key, 5)

    def lin(k, fan_in, fan_out):
        kw, kb = jax.random.split(k)
        bound = 1.0 / jnp.sqrt(jnp.float32(fan_in))
        w = jax.random.uniform(kw, (fan_in, fan_out), jnp.float32, -bound, bound)
        b = jax.random.uniform(kb, (1, fan_out), jnp.float32, -bound, bound)
        return w, b

    we, be = lin(ks[0], D_IN, EMBED)
    pj_w1, pj_b1 = lin(ks[1], EMBED, HIDDEN)
    pj_w2, pj_b2 = lin(ks[2], HIDDEN, PROJ)
    pd_w1, pd_b1 = lin(ks[3], PROJ, HIDDEN)
    pd_w2, pd_b2 = lin(ks[4], HIDDEN, PROJ)

    ones = lambda n: jnp.ones((1, n), jnp.float32)
    zeros = lambda n: jnp.zeros((1, n), jnp.float32)
    return dict(
        we=we, be=be,
        pj_w1=pj_w1, pj_b1=pj_b1, pj_g=ones(HIDDEN), pj_bt=zeros(HIDDEN),
        pj_w2=pj_w2, pj_b2=pj_b2,
        pd_w1=pd_w1, pd_b1=pd_b1, pd_g=ones(HIDDEN), pd_bt=zeros(HIDDEN),
        pd_w2=pd_w2, pd_b2=pd_b2,
    )


def pack_params(p):
    """Pack params into 3 arrays with no zero padding along any contraction dim."""
    # Encoder weight stored transposed [EMBED, D_IN] so both dims are dense in HBM.
    weT = jnp.transpose(p["we"]).astype(jnp.bfloat16)            # [32, 768] bf16

    def pad_n(w):                                                # pad output dim to 128 lanes
        out = jnp.zeros((w.shape[0], LANE), jnp.float32)
        return out.at[:, :w.shape[1]].set(w)

    w_slab = jnp.concatenate(
        [pad_n(p["pj_w1"]), pad_n(p["pj_w2"]),
         pad_n(p["pd_w1"]), pad_n(p["pd_w2"])], axis=0).astype(jnp.bfloat16)  # [176,128]
    assert w_slab.shape == (W_ROWS, LANE)

    vec_slab = jnp.zeros((N_VEC, LANE), jnp.float32)             # f32: feeds VPU math
    rows = [p["be"], p["pj_b1"], p["pj_g"], p["pj_bt"], p["pj_b2"],
            p["pd_b1"], p["pd_g"], p["pd_bt"], p["pd_b2"]]
    for i, v in enumerate(rows):
        v = v.reshape(-1)
        vec_slab = vec_slab.at[i, :v.shape[0]].set(v)

    return dict(weT=weT, w_slab=w_slab, vec_slab=vec_slab)


# ------------------------ pure-JAX reference (check) --------------------------
def simsiam_ref(x_nchw, p):
    xf = x_nchw.reshape(x_nchw.shape[0], -1)

    def bdot(a, w):   # same bf16-operand / f32-accumulate choice as the kernel
        return jnp.dot(a.astype(jnp.bfloat16), w.astype(jnp.bfloat16),
                       preferred_element_type=jnp.float32)

    emb = jnp.maximum(bdot(xf, p["we"]) + p["be"], 0.0)

    def mlp(h, w1, b1, g, bt, w2, b2):
        h1 = bdot(h, w1) + b1
        mu = h1.mean(0, keepdims=True)
        var = ((h1 - mu) ** 2).mean(0, keepdims=True)
        h1 = (h1 - mu) / jnp.sqrt(var + BN_EPS) * g + bt
        return bdot(jnp.maximum(h1, 0.0), w2) + b2

    proj = mlp(emb, p["pj_w1"], p["pj_b1"], p["pj_g"], p["pj_bt"], p["pj_w2"], p["pj_b2"])
    pred = mlp(proj, p["pd_w1"], p["pd_b1"], p["pd_g"], p["pd_bt"], p["pd_w2"], p["pd_b2"])

    def nrm(v):
        return v / jnp.maximum(jnp.linalg.norm(v, axis=-1, keepdims=True), NORM_EPS)

    loss = 2.0 - 2.0 * jnp.sum(nrm(pred) * nrm(proj), axis=-1)
    return loss.mean()


if __name__ == "__main__":
    key = jax.random.PRNGKey(0)
    pkey, xkey = jax.random.split(key)
    params = init_params(pkey)
    packed = pack_params(params)
    x = jax.random.normal(xkey, (B, C, IMG, IMG), jnp.float32)

    loss = simsiam_forward(x, packed["weT"], packed["w_slab"], packed["vec_slab"])
    jax.block_until_ready(loss)

    ref = simsiam_ref(x, params)
    # tolerance covers MXU vs XLA accumulation order, single-pass BN variance,
    # and the deliberate bf16 operand rounding shared by kernel and reference
    assert jnp.allclose(loss, ref, atol=5e-3, rtol=5e-3), (loss, ref)

    print("KERNEL_OK")
</pallas_src>

<mosaic_0001>
module attributes {stable_mosaic.version = 11 : i64} {
  func.func @simsiam_kernel(%arg0: memref<2x768xf32, #tpu.memory_space<vmem>>, %arg1: memref<32x768xbf16, #tpu.memory_space<vmem>>, %arg2: memref<176x128xbf16, #tpu.memory_space<vmem>>, %arg3: memref<9x128xf32, #tpu.memory_space<vmem>>, %arg4: memref<1x1xf32, #tpu.memory_space<vmem>>) attributes {dimension_semantics = [], scalar_prefetch = 0 : i64, scratch_operands = 0 : i64, tpu.core_type = #tpu.core_type<tc>} {
    %c0 = arith.constant 0 : index
    %c0_0 = arith.constant 0 : index
    %0 = vector.load %arg0[%c0, %c0_0] : memref<2x768xf32, #tpu.memory_space<vmem>>, vector<2x768xf32>
    %1 = arith.truncf %0 : vector<2x768xf32> to vector<2x768xbf16>
    %c0_1 = arith.constant 0 : index
    %c0_2 = arith.constant 0 : index
    %2 = vector.load %arg1[%c0_1, %c0_2] : memref<32x768xbf16, #tpu.memory_space<vmem>>, vector<32x768xbf16>
    %cst = arith.constant dense<0.000000e+00> : vector<2x32xf32>
    %3 = tpu.matmul %1, %2, %cst {dimension_numbers = #tpu.dot_dimension_numbers<[1], [1], [0], [0], [0, 0, 1, 0], [], []>} : vector<2x768xbf16>, vector<32x768xbf16>, vector<2x32xf32> -> vector<2x32xf32>
    %c0_3 = arith.constant 0 : index
    %c0_4 = arith.constant 0 : index
    %4 = vector.load %arg3[%c0_3, %c0_4] : memref<9x128xf32, #tpu.memory_space<vmem>>, vector<1x32xf32>
    %5 = vector.broadcast %4 : vector<1x32xf32> to vector<2x32xf32>
    %6 = arith.addf %3, %5 : vector<2x32xf32>
    %cst_5 = arith.constant 0.000000e+00 : f32
    %7 = vector.broadcast %cst_5 : f32 to vector<2x32xf32>
    %8 = arith.maximumf %6, %7 : vector<2x32xf32>
    %c0_6 = arith.constant 0 : index
    %c0_7 = arith.constant 0 : index
    %9 = vector.load %arg2[%c0_6, %c0_7] : memref<176x128xbf16, #tpu.memory_space<vmem>>, vector<32x128xbf16>
    %c1 = arith.constant 1 : index
    %c0_8 = arith.constant 0 : index
    %10 = vector.load %arg3[%c1, %c0_8] : memref<9x128xf32, #tpu.memory_space<vmem>>, vector<1x128xf32>
    %c2 = arith.constant 2 : index
    %c0_9 = arith.constant 0 : index
    %11 = vector.load %arg3[%c2, %c0_9] : memref<9x128xf32, #tpu.memory_space<vmem>>, vector<1x128xf32>
    %c3 = arith.constant 3 : index
    %c0_10 = arith.constant 0 : index
    %12 = vector.load %arg3[%c3, %c0_10] : memref<9x128xf32, #tpu.memory_space<vmem>>, vector<1x128xf32>
    %c32 = arith.constant 32 : index
    %c0_11 = arith.constant 0 : index
    %13 = vector.load %arg2[%c32, %c0_11] : memref<176x128xbf16, #tpu.memory_space<vmem>>, vector<64x128xbf16>
    %c4 = arith.constant 4 : index
    %c0_12 = arith.constant 0 : index
    %14 = vector.load %arg3[%c4, %c0_12] : memref<9x128xf32, #tpu.memory_space<vmem>>, vector<1x128xf32>
    %15 = arith.truncf %8 : vector<2x32xf32> to vector<2x32xbf16>
    %cst_13 = arith.constant dense<0.000000e+00> : vector<2x128xf32>
    %16 = tpu.matmul %15, %9, %cst_13 {dimension_numbers = #tpu.dot_dimension_numbers<[1], [0], [0], [1], [0, 0, 1, 1], [], []>} : vector<2x32xbf16>, vector<32x128xbf16>, vector<2x128xf32> -> vector<2x128xf32>
    %17 = vector.broadcast %10 : vector<1x128xf32> to vector<2x128xf32>
    %18 = arith.addf %16, %17 : vector<2x128xf32>
    %cst_14 = arith.constant dense<0.000000e+00> : vector<128xf32>
    %19 = vector.multi_reduction <add>, %18, %cst_14 [0] : vector<2x128xf32> to vector<128xf32>
    %20 = vector.shape_cast %19 : vector<128xf32> to vector<1x128xf32>
    %cst_15 = arith.constant 2.000000e+00 : f32
    %21 = vector.broadcast %cst_15 : f32 to vector<1x128xf32>
    %22 = arith.divf %20, %21 : vector<1x128xf32>
    %23 = arith.mulf %18, %18 : vector<2x128xf32>
    %cst_16 = arith.constant dense<0.000000e+00> : vector<128xf32>
    %24 = vector.multi_reduction <add>, %23, %cst_16 [0] : vector<2x128xf32> to vector<128xf32>
    %25 = vector.shape_cast %24 : vector<128xf32> to vector<1x128xf32>
    %cst_17 = arith.constant 2.000000e+00 : f32
    %26 = vector.broadcast %cst_17 : f32 to vector<1x128xf32>
    %27 = arith.divf %25, %26 : vector<1x128xf32>
    %28 = arith.mulf %22, %22 : vector<1x128xf32>
    %29 = arith.subf %27, %28 : vector<1x128xf32>
    %cst_18 = arith.constant 0.000000e+00 : f32
    %30 = vector.broadcast %cst_18 : f32 to vector<1x128xf32>
    %31 = arith.maximumf %29, %30 : vector<1x128xf32>
    %32 = vector.broadcast %22 : vector<1x128xf32> to vector<2x128xf32>
    %33 = arith.subf %18, %32 : vector<2x128xf32>
    %cst_19 = arith.constant 9.99999974E-6 : f32
    %34 = vector.broadcast %cst_19 : f32 to vector<1x128xf32>
    %35 = arith.addf %31, %34 : vector<1x128xf32>
    %36 = math.rsqrt %35 : vector<1x128xf32>
    %37 = vector.broadcast %36 : vector<1x128xf32> to vector<2x128xf32>
    %38 = arith.mulf %33, %37 : vector<2x128xf32>
    %39 = vector.broadcast %11 : vector<1x128xf32> to vector<2x128xf32>
    %40 = arith.mulf %38, %39 : vector<2x128xf32>
    %41 = vector.broadcast %12 : vector<1x128xf32> to vector<2x128xf32>
    %42 = arith.addf %40, %41 : vector<2x128xf32>
    %cst_20 = arith.constant 0.000000e+00 : f32
    %43 = vector.broadcast %cst_20 : f32 to vector<2x128xf32>
    %44 = arith.maximumf %42, %43 : vector<2x128xf32>
    %45 = vector.extract_strided_slice %44 {offsets = [0, 0], sizes = [2, 64], strides = [1, 1]} : vector<2x128xf32> to vector<2x64xf32>
    %46 = arith.truncf %45 : vector<2x64xf32> to vector<2x64xbf16>
    %cst_21 = arith.constant dense<0.000000e+00> : vector<2x128xf32>
    %47 = tpu.matmul %46, %13, %cst_21 {dimension_numbers = #tpu.dot_dimension_numbers<[1], [0], [0], [1], [0, 0, 1, 1], [], []>} : vector<2x64xbf16>, vector<64x128xbf16>, vector<2x128xf32> -> vector<2x128xf32>
    %48 = vector.broadcast %14 : vector<1x128xf32> to vector<2x128xf32>
    %49 = arith.addf %47, %48 : vector<2x128xf32>
    %c96 = arith.constant 96 : index
    %c0_22 = arith.constant 0 : index
    %50 = vector.load %arg2[%c96, %c0_22] : memref<176x128xbf16, #tpu.memory_space<vmem>>, vector<16x128xbf16>
    %c5 = arith.constant 5 : index
    %c0_23 = arith.constant 0 : index
    %51 = vector.load %arg3[%c5, %c0_23] : memref<9x128xf32, #tpu.memory_space<vmem>>, vector<1x128xf32>
    %c6 = arith.constant 6 : index
    %c0_24 = arith.constant 0 : index
    %52 = vector.load %arg3[%c6, %c0_24] : memref<9x128xf32, #tpu.memory_space<vmem>>, vector<1x128xf32>
    %c7 = arith.constant 7 : index
    %c0_25 = arith.constant 0 : index
    %53 = vector.load %arg3[%c7, %c0_25] : memref<9x128xf32, #tpu.memory_space<vmem>>, vector<1x128xf32>
    %c112 = arith.constant 112 : index
    %c0_26 = arith.constant 0 : index
    %54 = vector.load %arg2[%c112, %c0_26] : memref<176x128xbf16, #tpu.memory_space<vmem>>, vector<64x128xbf16>
    %c8 = arith.constant 8 : index
    %c0_27 = arith.constant 0 : index
    %55 = vector.load %arg3[%c8, %c0_27] : memref<9x128xf32, #tpu.memory_space<vmem>>, vector<1x128xf32>
    %56 = vector.extract_strided_slice %49 {offsets = [0, 0], sizes = [2, 16], strides = [1, 1]} : vector<2x128xf32> to vector<2x16xf32>
    %57 = arith.truncf %56 : vector<2x16xf32> to vector<2x16xbf16>
    %cst_28 = arith.constant dense<0.000000e+00> : vector<2x128xf32>
    %58 = tpu.matmul %57, %50, %cst_28 {dimension_numbers = #tpu.dot_dimension_numbers<[1], [0], [0], [1], [0, 0, 1, 1], [], []>} : vector<2x16xbf16>, vector<16x128xbf16>, vector<2x128xf32> -> vector<2x128xf32>
    %59 = vector.broadcast %51 : vector<1x128xf32> to vector<2x128xf32>
    %60 = arith.addf %58, %59 : vector<2x128xf32>
    %cst_29 = arith.constant dense<0.000000e+00> : vector<128xf32>
    %61 = vector.multi_reduction <add>, %60, %cst_29 [0] : vector<2x128xf32> to vector<128xf32>
    %62 = vector.shape_cast %61 : vector<128xf32> to vector<1x128xf32>
    %cst_30 = arith.constant 2.000000e+00 : f32
    %63 = vector.broadcast %cst_30 : f32 to vector<1x128xf32>
    %64 = arith.divf %62, %63 : vector<1x128xf32>
    %65 = arith.mulf %60, %60 : vector<2x128xf32>
    %cst_31 = arith.constant dense<0.000000e+00> : vector<128xf32>
    %66 = vector.multi_reduction <add>, %65, %cst_31 [0] : vector<2x128xf32> to vector<128xf32>
    %67 = vector.shape_cast %66 : vector<128xf32> to vector<1x128xf32>
    %cst_32 = arith.constant 2.000000e+00 : f32
    %68 = vector.broadcast %cst_32 : f32 to vector<1x128xf32>
    %69 = arith.divf %67, %68 : vector<1x128xf32>
    %70 = arith.mulf %64, %64 : vector<1x128xf32>
    %71 = arith.subf %69, %70 : vector<1x128xf32>
    %cst_33 = arith.constant 0.000000e+00 : f32
    %72 = vector.broadcast %cst_33 : f32 to vector<1x128xf32>
    %73 = arith.maximumf %71, %72 : vector<1x128xf32>
    %74 = vector.broadcast %64 : vector<1x128xf32> to vector<2x128xf32>
    %75 = arith.subf %60, %74 : vector<2x128xf32>
    %cst_34 = arith.constant 9.99999974E-6 : f32
    %76 = vector.broadcast %cst_34 : f32 to vector<1x128xf32>
    %77 = arith.addf %73, %76 : vector<1x128xf32>
    %78 = math.rsqrt %77 : vector<1x128xf32>
    %79 = vector.broadcast %78 : vector<1x128xf32> to vector<2x128xf32>
    %80 = arith.mulf %75, %79 : vector<2x128xf32>
    %81 = vector.broadcast %52 : vector<1x128xf32> to vector<2x128xf32>
    %82 = arith.mulf %80, %81 : vector<2x128xf32>
    %83 = vector.broadcast %53 : vector<1x128xf32> to vector<2x128xf32>
    %84 = arith.addf %82, %83 : vector<2x128xf32>
    %cst_35 = arith.constant 0.000000e+00 : f32
    %85 = vector.broadcast %cst_35 : f32 to vector<2x128xf32>
    %86 = arith.maximumf %84, %85 : vector<2x128xf32>
    %87 = vector.extract_strided_slice %86 {offsets = [0, 0], sizes = [2, 64], strides = [1, 1]} : vector<2x128xf32> to vector<2x64xf32>
    %88 = arith.truncf %87 : vector<2x64xf32> to vector<2x64xbf16>
    %cst_36 = arith.constant dense<0.000000e+00> : vector<2x128xf32>
    %89 = tpu.matmul %88, %54, %cst_36 {dimension_numbers = #tpu.dot_dimension_numbers<[1], [0], [0], [1], [0, 0, 1, 1], [], []>} : vector<2x64xbf16>, vector<64x128xbf16>, vector<2x128xf32> -> vector<2x128xf32>
    %90 = vector.broadcast %55 : vector<1x128xf32> to vector<2x128xf32>
    %91 = arith.addf %89, %90 : vector<2x128xf32>
    %92 = arith.mulf %91, %91 : vector<2x128xf32>
    %cst_37 = arith.constant dense<0.000000e+00> : vector<2xf32>
    %93 = vector.multi_reduction <add>, %92, %cst_37 [1] : vector<2x128xf32> to vector<2xf32>
    %94 = vector.shape_cast %93 : vector<2xf32> to vector<2x1xf32>
    %95 = arith.mulf %49, %49 : vector<2x128xf32>
    %cst_38 = arith.constant dense<0.000000e+00> : vector<2xf32>
    %96 = vector.multi_reduction <add>, %95, %cst_38 [1] : vector<2x128xf32> to vector<2xf32>
    %97 = vector.shape_cast %96 : vector<2xf32> to vector<2x1xf32>
    %98 = arith.mulf %91, %49 : vector<2x128xf32>
    %cst_39 = arith.constant dense<0.000000e+00> : vector<2xf32>
    %99 = vector.multi_reduction <add>, %98, %cst_39 [1] : vector<2x128xf32> to vector<2xf32>
    %100 = vector.shape_cast %99 : vector<2xf32> to vector<2x1xf32>
    %cst_40 = arith.constant 1.000000e-24 : f32
    %101 = vector.broadcast %cst_40 : f32 to vector<2x1xf32>
    %102 = arith.maximumf %94, %101 : vector<2x1xf32>
    %cst_41 = arith.constant 1.000000e-24 : f32
    %103 = vector.broadcast %cst_41 : f32 to vector<2x1xf32>
    %104 = arith.maximumf %97, %103 : vector<2x1xf32>
    %105 = arith.mulf %102, %104 : vector<2x1xf32>
    %106 = math.rsqrt %105 : vector<2x1xf32>
    %107 = arith.mulf %100, %106 : vector<2x1xf32>
    %cst_42 = arith.constant 2.000000e+00 : f32
    %108 = vector.broadcast %cst_42 : f32 to vector<2x1xf32>
    %109 = arith.mulf %108, %107 : vector<2x1xf32>
    %cst_43 = arith.constant 2.000000e+00 : f32
    %110 = vector.broadcast %cst_43 : f32 to vector<2x1xf32>
    %111 = arith.subf %110, %109 : vector<2x1xf32>
    %cst_44 = arith.constant dense<0.000000e+00> : vector<1xf32>
    %112 = vector.multi_reduction <add>, %111, %cst_44 [0] : vector<2x1xf32> to vector<1xf32>
    %113 = vector.shape_cast %112 : vector<1xf32> to vector<1x1xf32>
    %cst_45 = arith.constant 2.000000e+00 : f32
    %114 = vector.broadcast %cst_45 : f32 to vector<1x1xf32>
    %115 = arith.divf %113, %114 : vector<1x1xf32>
    %c0_46 = arith.constant 0 : index
    %c0_47 = arith.constant 0 : index
    %116 = vector.load %arg4[%c0_46, %c0_47] : memref<1x1xf32, #tpu.memory_space<vmem>>, vector<1x1xf32>
    tpu.vector_store %arg4[%c0_46, %c0_47], %115 {strides = array<i32>} : memref<1x1xf32, #tpu.memory_space<vmem>>, vector<1x1xf32>,
    return
  }
}

</mosaic_0001>

<llo_original>
// kernel: simsiam_forward.1
$region0: #{simsiam_forward.1}
  #allocation0 [shape = 'u32[]', space=smem, size = 0x4, offset = 0x4, fixed_abs, tag = 'smem constant byte address 0x4 - core index']
  #allocation1 [shape = 'u32[144,128]{1,0:T(1,128)}', space=vmem, size = 0x12000, scoped, tag = 'internal scratch']
  %s0 = inlined_call_operand.vmem [shape: f32[2,768], index: 0, kind: input, shape index: {}]
  %s1 = inlined_call_operand.vmem [shape: bf16[32,768], index: 1, kind: input, shape index: {}]
  %s2 = inlined_call_operand.hbm [shape: bf16[176,128], index: 2, kind: input, shape index: {}]
  %s3 = inlined_call_operand.vmem [shape: f32[9,128], index: 3, kind: input, shape index: {}]
  %s4 = inlined_call_operand.hbm [shape: f32[1,1], index: 4, kind: output, shape index: {}]
  %s5 = sld [smem:[#allocation0]]
  $region30: #{simsiam_forward.1} parent=0
    _
  %s7 = ssub.s32 1, %s5
  %s8 = scalar_select 0, %s7, %s5
  $region1: #{simsiam_forward.1} parent=0
    #allocation2 [shape = 'u8[45056]{0}', space=vmem, size = 0xb000, scoped, tag = 'input window, operand 2, single buffered']
    #allocation3 [shape = 's32[1]{0}', space=sflag, size = 0x4, scoped, tag = 'scoped memory for simsiam_forward.1']
    #allocation4 [shape = 's32[1]{0}', space=sflag, size = 0x4, scoped, tag = 'scoped memory for simsiam_forward.1']
    #allocation5 [shape = 'u8[512]{0}', space=vmem, size = 0x400, scoped, tag = 'output window, operand 0, single buffered']
    %9 = vsyncpa [#allocation3], 0
    %10 = vsyncpa [#allocation4], 0
    // Predicated region
    $region2: #{simsiam_forward.1} parent=1 // pred_check
      _
    $region3: #{simsiam_forward.1} parent=1 // pred_check_branch
      %12 = sbr.rel (0) target = $region5
    $region4: #{simsiam_forward.1} parent=1 // pred_region
      _
    $region5: #{simsiam_forward.1} parent=1 // pred_fallthru
      _
    // Predicated region
    $region6: #{simsiam_forward.1} parent=1 // pred_check
      _
    $region7: #{simsiam_forward.1} parent=1 // pred_check_branch
      %14 = sbr.rel (0) target = $region9
    $region8: #{simsiam_forward.1} parent=1 // pred_region
      _
    $region9: #{simsiam_forward.1} parent=1 // pred_fallthru
      _
    // Predicated region
    $region10: #{simsiam_forward.1} parent=1 // pred_check
      _
    $region11: #{simsiam_forward.1} parent=1 // pred_check_branch
      %16 = sbr.rel (0) target = $region13
    $region12: #{simsiam_forward.1} parent=1 // pred_region
      %s18 = ssub.s32 1408, 1408
      %19 = vsyncadd [#allocation3], %s18
      %s20 = sshll.u32 [#allocation2], 4
      %s21 = int_to_ptr.vmem [resolvable:$true] %s20
      %26 = dma.hbm_to_vmem [thread:$0]  %s2, 1408, %s21, [#allocation3], 64, 64, 4
    $region13: #{simsiam_forward.1} parent=1 // pred_fallthru
      _
    // Predicated region
    $region14: #{simsiam_forward.1} parent=1 // pred_check
      _
    $region15: #{simsiam_forward.1} parent=1 // pred_check_branch
      %28 = sbr.rel (0) target = $region17
    $region16: #{simsiam_forward.1} parent=1 // pred_region
      _
    $region17: #{simsiam_forward.1} parent=1 // pred_fallthru
      _
    // Predicated region
    $region18: #{simsiam_forward.1} parent=1 // pred_check
      _
    $region19: #{simsiam_forward.1} parent=1 // pred_check_branch
      %30 = sbr.rel (0) target = $region21
    $region20: #{simsiam_forward.1} parent=1 // pred_region
      %31 = dma.done [#allocation3], 1408
    $region21: #{simsiam_forward.1} parent=1 // pred_fallthru
      _
    %v33 = vld [vmem:[%s0] sm:$0xff]
    %v34 = vld [vmem:[%s0 + $0x8] sm:$0xf]
    %v37 = vcombine.high %v33, %v33
    %v39 = vunpack.c.l.s4 1983009808
    %v40 = vunpack.c.0.s8 %v39
    %v41 = vlaneseq
    %v42 = vshrl.u32 %v41, 7
    %v43 = vsub.s32 %v40, %v42
    %v44 = vrot.slane %v33, %v43
    %v46 = vunpack.c.l.s4 1983009808
    %v47 = vunpack.c.0.s8 %v46
    %v48 = vlaneseq
    %v49 = vshrl.u32 %v48, 7
    %v50 = vsub.s32 %v47, %v49
    %v51 = vrot.slane %v37, %v50
    %v52 = vcombine.high %v44, %v44
    %v53 = vcombine.high %v51, %v51
    %v55 = vunpack.c.l.s4 1983009808
    %v56 = vunpack.c.0.s8 %v55
    %v57 = vlaneseq
    %v58 = vshrl.u32 %v57, 7
    %v59 = vsub.s32 %v56, %v58
    %v60 = vrot.slane %v34, %v59
    %v61 = vcombine.high %v60, %v60
    %v68 = vpack.c.bf16 %v44, %v44
    %v69 = vpack.c.bf16 %v52, %v52
    %v70 = vpack.c.bf16 %v51, %v51
    %v71 = vpack.c.bf16 %v53, %v53
    %v72 = vpack.c.bf16 %v60, %v60
    %v73 = vpack.c.bf16 %v61, %v61
    %v74 = vld [vmem:[%s1] sm:$0xff]
    %v75 = vld [vmem:[%s1 + $0x8] sm:$0xff]
    %v76 = vld [vmem:[%s1 + $0x10] sm:$0xff]
    %v77 = vld [vmem:[%s1 + $0x18] sm:$0xff]
    %v78 = vld [vmem:[%s1 + $0x20] sm:$0xff]
    %v79 = vld [vmem:[%s1 + $0x28] sm:$0xff]
    %v80 = vld [vmem:[%s1 + $0x30] sm:$0xff]
    %v81 = vld [vmem:[%s1 + $0x38] sm:$0xff]
    %v82 = vld [vmem:[%s1 + $0x40] sm:$0xff]
    %v83 = vld [vmem:[%s1 + $0x48] sm:$0xff]
    %v84 = vld [vmem:[%s1 + $0x50] sm:$0xff]
    %v85 = vld [vmem:[%s1 + $0x58] sm:$0xff]
    %v86 = vld [vmem:[%s3] sm:$0x1]
    %v87 = vlaneseq
    %v88 = vshrl.u32 %v87, 7
    %v89 = vsub.s32 0, %v88
    %v90 = vrot.slane %v86, %v89
    %v103 = vunpack.c.l.b16 %v74
    %v104 = vunpack.c.h.b16 %v74
    %v105 = vunpack.c.l.b16 %v75
    %v106 = vunpack.c.h.b16 %v75
    %v107 = vunpack.c.l.b16 %v76
    %v108 = vunpack.c.h.b16 %v76
    %v109 = vunpack.c.l.b16 %v77
    %v110 = vunpack.c.h.b16 %v77
    %v111 = vunpack.c.l.b16 %v78
    %v112 = vunpack.c.h.b16 %v78
    %v113 = vunpack.c.l.b16 %v79
    %v114 = vunpack.c.h.b16 %v79
    %v115 = vunpack.c.l.b16 %v80
    %v116 = vunpack.c.h.b16 %v80
    %v117 = vunpack.c.l.b16 %v81
    %v118 = vunpack.c.h.b16 %v81
    %v119 = vunpack.c.l.b16 %v82
    %v120 = vunpack.c.h.b16 %v82
    %v121 = vunpack.c.l.b16 %v83
    %v122 = vunpack.c.h.b16 %v83
    %v123 = vunpack.c.l.b16 %v84
    %v124 = vunpack.c.h.b16 %v84
    %v125 = vunpack.c.l.b16 %v85
    %v126 = vunpack.c.h.b16 %v85
    %v127 = vpack.c.b16 %v109, %v103
    %v128 = vpack.c.b16 %v110, %v104
    %v129 = vpack.c.b16 %v111, %v105
    %v130 = vpack.c.b16 %v112, %v106
    %v131 = vpack.c.b16 %v113, %v107
    %v132 = vpack.c.b16 %v114, %v108
    %v133 = vpack.c.b16 %v121, %v115
    %v134 = vpack.c.b16 %v122, %v116
    %v135 = vpack.c.b16 %v123, %v117
    %v136 = vpack.c.b16 %v124, %v118
    %v137 = vpack.c.b16 %v125, %v119
    %v138 = vpack.c.b16 %v126, %v120
    %151 = vmatprep.subr.bf16.mxu0 0
    %152 = vmatpush1.bf16.xpose.msra.mxu0 0
    %153 = vmatprep.subr.bf16.mxu0 0
    %154 = vmatpush1.bf16.xpose.msra.mxu0 0
    %155 = vmatprep.subr.bf16.mxu0 0
    %156 = vmatpush1.bf16.xpose.msra.mxu0 0
    %157 = vmatprep.subr.bf16.mxu0 0
    %158 = vmatpush1.bf16.xpose.msra.mxu0 0
    %159 = vmatprep.subr.bf16.mxu0 0
    %160 = vmatpush1.bf16.xpose.msra.mxu0 0
    %161 = vmatprep.subr.bf16.mxu0 0
    %162 = vmatpush1.bf16.xpose.msra.mxu0 0
    %163 = vmatprep.subr.bf16.mxu0 %v134
    %164 = vmatpush1.bf16.xpose.msra.mxu0 %v133
    %165 = vmatprep.subr.bf16.mxu0 %v128
    %166 = vmatpush1.bf16.xpose.msra.mxu0 %v127
    %167 = vmatprep.subr.bf16.mxu0 0
    %168 = vmatpush2.bf16.xpose.msra.mxu0 0
    %169 = vmatprep.subr.bf16.mxu0 0
    %170 = vmatpush2.bf16.xpose.msra.mxu0 0
    %171 = vmatprep.subr.bf16.mxu0 0
    %172 = vmatpush2.bf16.xpose.msra.mxu0 0
    %173 = vmatprep.subr.bf16.mxu0 0
    %174 = vmatpush2.bf16.xpose.msra.mxu0 0
    %175 = vmatprep.subr.bf16.mxu0 0
    %176 = vmatpush2.bf16.xpose.msra.mxu0 0
    %177 = vmatprep.subr.bf16.mxu0 0
    %178 = vmatpush2.bf16.xpose.msra.mxu0 0
    %179 = vmatprep.subr.bf16.mxu0 0
    %180 = vmatpush2.bf16.xpose.msra.mxu0 0
    %181 = vmatprep.subr.bf16.mxu0 0
    %182 = vmatpush2.bf16.xpose.msra.mxu0 0
    %183 = vmatprep.mubr.bf16.mxu0 %v69
    %184 = vmatmul.mubr.bf16.gmra.mxu0 %v68
    %v185 = vpop.f32.mrf.mxu0
    %v186 = vadd.f32 %v90, %v185
    %v187 = vpop.f32.mrf.mxu0
    %v188 = vpop.f32.mrf.mxu0
    %v189 = vpop.f32.mrf.mxu0
    %190 = vdwg.mxu0
    %191 = vmatprep.subr.bf16.mxu0 0
    %192 = vmatpush1.bf16.xpose.msra.mxu0 0
    %193 = vmatprep.subr.bf16.mxu0 0
    %194 = vmatpush1.bf16.xpose.msra.mxu0 0
    %195 = vmatprep.subr.bf16.mxu0 0
    %196 = vmatpush1.bf16.xpose.msra.mxu0 0
    %197 = vmatprep.subr.bf16.mxu0 0
    %198 = vmatpush1.bf16.xpose.msra.mxu0 0
    %199 = vmatprep.subr.bf16.mxu0 0
    %200 = vmatpush1.bf16.xpose.msra.mxu0 0
    %201 = vmatprep.subr.bf16.mxu0 0
    %202 = vmatpush1.bf16.xpose.msra.mxu0 0
    %203 = vmatprep.subr.bf16.mxu0 %v136
    %204 = vmatpush1.bf16.xpose.msra.mxu0 %v135
    %205 = vmatprep.subr.bf16.mxu0 %v130
    %206 = vmatpush1.bf16.xpose.msra.mxu0 %v129
    %207 = vmatprep.subr.bf16.mxu0 0
    %208 = vmatpush2.bf16.xpose.msra.mxu0 0
    %209 = vmatprep.subr.bf16.mxu0 0
    %210 = vmatpush2.bf16.xpose.msra.mxu0 0
    %211 = vmatprep.subr.bf16.mxu0 0
    %212 = vmatpush2.bf16.xpose.msra.mxu0 0
    %213 = vmatprep.subr.bf16.mxu0 0
    %214 = vmatpush2.bf16.xpose.msra.mxu0 0
    %215 = vmatprep.subr.bf16.mxu0 0
    %216 = vmatpush2.bf16.xpose.msra.mxu0 0
    %217 = vmatprep.subr.bf16.mxu0 0
    %218 = vmatpush2.bf16.xpose.msra.mxu0 0
    %219 = vmatprep.subr.bf16.mxu0 0
    %220 = vmatpush2.bf16.xpose.msra.mxu0 0
    %221 = vmatprep.subr.bf16.mxu0 0
    %222 = vmatpush2.bf16.xpose.msra.mxu0 0
    %223 = vmatprep.mubr.bf16.mxu0 %v71
    %224 = vmatmul.mubr.bf16.gmra.mxu0 %v70
    %v225 = vpop.f32.mrf.mxu0
    %v226 = vadd.f32 %v186, %v225
    %v227 = vpop.f32.mrf.mxu0
    %v228 = vpop.f32.mrf.mxu0
    %v229 = vpop.f32.mrf.mxu0
    %230 = vdwg.mxu0
    %231 = vmatprep.subr.bf16.mxu0 0
    %232 = vmatpush1.bf16.xpose.msra.mxu0 0
    %233 = vmatprep.subr.bf16.mxu0 0
    %234 = vmatpush1.bf16.xpose.msra.mxu0 0
    %235 = vmatprep.subr.bf16.mxu0 0
    %236 = vmatpush1.bf16.xpose.msra.mxu0 0
    %237 = vmatprep.subr.bf16.mxu0 0
    %238 = vmatpush1.bf16.xpose.msra.mxu0 0
    %239 = vmatprep.subr.bf16.mxu0 0
    %240 = vmatpush1.bf16.xpose.msra.mxu0 0
    %241 = vmatprep.subr.bf16.mxu0 0
    %242 = vmatpush1.bf16.xpose.msra.mxu0 0
    %243 = vmatprep.subr.bf16.mxu0 %v138
    %244 = vmatpush1.bf16.xpose.msra.mxu0 %v137
    %245 = vmatprep.subr.bf16.mxu0 %v132
    %246 = vmatpush1.bf16.xpose.msra.mxu0 %v131
    %247 = vmatprep.subr.bf16.mxu0 0
    %248 = vmatpush2.bf16.xpose.msra.mxu0 0
    %249 = vmatprep.subr.bf16.mxu0 0
    %250 = vmatpush2.bf16.xpose.msra.mxu0 0
    %251 = vmatprep.subr.bf16.mxu0 0
    %252 = vmatpush2.bf16.xpose.msra.mxu0 0
    %253 = vmatprep.subr.bf16.mxu0 0
    %254 = vmatpush2.bf16.xpose.msra.mxu0 0
    %255 = vmatprep.subr.bf16.mxu0 0
    %256 = vmatpush2.bf16.xpose.msra.mxu0 0
    %257 = vmatprep.subr.bf16.mxu0 0
    %258 = vmatpush2.bf16.xpose.msra.mxu0 0
    %259 = vmatprep.subr.bf16.mxu0 0
    %260 = vmatpush2.bf16.xpose.msra.mxu0 0
    %261 = vmatprep.subr.bf16.mxu0 0
    %262 = vmatpush2.bf16.xpose.msra.mxu0 0
    %263 = vmatprep.mubr.bf16.mxu0 %v73
    %264 = vmatmul.mubr.bf16.gmra.mxu0 %v72
    %v265 = vpop.f32.mrf.mxu0
    %v266 = vadd.f32 %v226, %v265
    %v267 = vpop.f32.mrf.mxu0
    %v268 = vpop.f32.mrf.mxu0
    %v269 = vpop.f32.mrf.mxu0
    %270 = vdwg.mxu0
    %v271 = vmax.f32 %v266, 0.0
    %v272 = vld [vmem:[#allocation2] sm:$0xf]
    %v273 = vld [vmem:[#allocation2 + $0x4] sm:$0xf]
    %v274 = vld [vmem:[#allocation2 + $0x8] sm:$0xf]
    %v275 = vld [vmem:[#allocation2 + $0xc] sm:$0xf]
    %v276 = vld [vmem:[%s3 + $0x1] sm:$0x1]
    %v277 = vld [vmem:[%s3 + $0x2] sm:$0x1]
    %v278 = vld [vmem:[%s3 + $0x3] sm:$0x1]
    %v279 = vld [vmem:[#allocation2 + $0x10] sm:$0xf]
    %v280 = vld [vmem:[#allocation2 + $0x14] sm:$0xf]
    %v281 = vld [vmem:[#allocation2 + $0x18] sm:$0xf]
    %v282 = vld [vmem:[#allocation2 + $0x1c] sm:$0xf]
    %v283 = vld [vmem:[#allocation2 + $0x20] sm:$0xf]
    %v284 = vld [vmem:[#allocation2 + $0x24] sm:$0xf]
    %v285 = vld [vmem:[#allocation2 + $0x28] sm:$0xf]
    %v286 = vld [vmem:[#allocation2 + $0x2c] sm:$0xf]
    %v287 = vld [vmem:[%s3 + $0x4] sm:$0x1]
    %v288 = vpack.c.bf16 %v271, %v271
    %v289 = vlaneseq
    %v290 = vshrl.u32 %v289, 7
    %v291 = vsub.s32 0, %v290
    %v292 = vrot.slane %v276, %v291
    %v297 = vunpack.c.l.b16 %v272
    %v298 = vunpack.c.l.b16 %v273
    %v299 = vunpack.c.l.b16 %v274
    %v300 = vunpack.c.l.b16 %v275
    %v301 = vpack.c.b16 %v298, %v297
    %v302 = vpack.c.b16 %v300, %v299
    %vm305 = vcmask 261120
    %v307 = vsel %vm305, %v288, 0
    %309 = vmatprep.subr.bf16.mxu0 0
    %310 = vmatpush1.bf16.msra.mxu0 0
    %311 = vmatprep.subr.bf16.mxu0 0
    %312 = vmatpush1.bf16.msra.mxu0 0
    %313 = vmatprep.subr.bf16.mxu0 0
    %314 = vmatpush1.bf16.msra.mxu0 0
    %315 = vmatprep.subr.bf16.mxu0 0
    %316 = vmatpush1.bf16.msra.mxu0 0
    %317 = vmatprep.subr.bf16.mxu0 0
    %318 = vmatpush1.bf16.msra.mxu0 0
    %319 = vmatprep.subr.bf16.mxu0 0
    %320 = vmatpush1.bf16.msra.mxu0 0
    %321 = vmatprep.subr.bf16.mxu0 0
    %322 = vmatpush1.bf16.msra.mxu0 %v302
    %323 = vmatprep.subr.bf16.mxu0 0
    %324 = vmatpush1.bf16.msra.mxu0 %v301
    %325 = vmatprep.subr.bf16.mxu0 0
    %326 = vmatpush2.bf16.msra.mxu0 0
    %327 = vmatprep.subr.bf16.mxu0 0
    %328 = vmatpush2.bf16.msra.mxu0 0
    %329 = vmatprep.subr.bf16.mxu0 0
    %330 = vmatpush2.bf16.msra.mxu0 0
    %331 = vmatprep.subr.bf16.mxu0 0
    %332 = vmatpush2.bf16.msra.mxu0 0
    %333 = vmatprep.subr.bf16.mxu0 0
    %334 = vmatpush2.bf16.msra.mxu0 0
    %335 = vmatprep.subr.bf16.mxu0 0
    %336 = vmatpush2.bf16.msra.mxu0 0
    %337 = vmatprep.subr.bf16.mxu0 0
    %338 = vmatpush2.bf16.msra.mxu0 0
    %339 = vmatprep.subr.bf16.mxu0 0
    %340 = vmatpush2.bf16.msra.mxu0 0
    %341 = vmatprep.mubr.bf16.mxu0 0
    %342 = vmatmul.mubr.bf16.gmra.mxu0 %v307
    %v343 = vpop.f32.mrf.mxu0
    %v344 = vadd.f32 %v292, %v343
    %v345 = vpop.f32.mrf.mxu0
    %v346 = vpop.f32.mrf.mxu0
    %v347 = vpop.f32.mrf.mxu0
    %348 = vdwg.mxu0
    %vm349 = vcmask 1041408
    %v350 = vsel %vm349, %v344, 0.0
    %v351 = vrot.slane %v350, 4
    %v352 = vadd.f32 %v350, %v351
    %v353 = vrot.slane %v352, 2
    %v354 = vadd.f32 %v352, %v353
    %v355 = vrot.slane %v354, 1
    %v356 = vadd.f32 %v354, %v355
    %v357 = vrcp.pop 2.0
    %v358 = vmul.f32 %v356, %v357
    %v359 = vmul.f32 %v344, %v344
    %v360 = vsel %vm349, %v359, 0.0
    %v361 = vrot.slane %v360, 4
    %v362 = vadd.f32 %v360, %v361
    %v363 = vrot.slane %v362, 2
    %v364 = vadd.f32 %v362, %v363
    %v365 = vrot.slane %v364, 1
    %v366 = vadd.f32 %v364, %v365
    %v367 = vmul.f32 %v366, %v357
    %v368 = vmul.f32 %v358, %v358
    %v369 = vsub.f32 %v367, %v368
    %v370 = vmax.f32 %v369, 0.0
    %v371 = vsub.f32 %v344, %v358
    %v372 = vadd.f32 %v370, 1e-05
    %v373 = vrsqrt.pop %v372
    %v374 = vmul.f32 %v371, %v373
    %v375 = vlaneseq
    %v376 = vshrl.u32 %v375, 7
    %v377 = vsub.s32 0, %v376
    %v378 = vrot.slane %v277, %v377
    %v379 = vmul.f32 %v374, %v378
    %v380 = vlaneseq
    %v381 = vshrl.u32 %v380, 7
    %v382 = vsub.s32 0, %v381
    %v383 = vrot.slane %v278, %v382
    %v384 = vadd.f32 %v379, %v383
    %v385 = vmax.f32 %v384, 0.0
    %v386 = vpack.c.bf16 %v385, %v385
    %v387 = vlaneseq
    %v388 = vshrl.u32 %v387, 7
    %v389 = vsub.s32 0, %v388
    %v390 = vrot.slane %v287, %v389
    %v399 = vunpack.c.l.b16 %v279
    %v400 = vunpack.c.l.b16 %v280
    %v401 = vunpack.c.l.b16 %v281
    %v402 = vunpack.c.l.b16 %v282
    %v403 = vunpack.c.l.b16 %v283
    %v404 = vunpack.c.l.b16 %v284
    %v405 = vunpack.c.l.b16 %v285
    %v406 = vunpack.c.l.b16 %v286
    %v407 = vpack.c.b16 %v400, %v399
    %v408 = vpack.c.b16 %v402, %v401
    %v409 = vpack.c.b16 %v404, %v403
    %v410 = vpack.c.b16 %v406, %v405
    %vm415 = vcmask 523264
    %v417 = vsel %vm415, %v386, 0
    %419 = vmatprep.subr.bf16.mxu0 0
    %420 = vmatpush1.bf16.msra.mxu0 0
    %421 = vmatprep.subr.bf16.mxu0 0
    %422 = vmatpush1.bf16.msra.mxu0 0
    %423 = vmatprep.subr.bf16.mxu0 0
    %424 = vmatpush1.bf16.msra.mxu0 0
    %425 = vmatprep.subr.bf16.mxu0 0
    %426 = vmatpush1.bf16.msra.mxu0 0
    %427 = vmatprep.subr.bf16.mxu0 0
    %428 = vmatpush1.bf16.msra.mxu0 %v410
    %429 = vmatprep.subr.bf16.mxu0 0
    %430 = vmatpush1.bf16.msra.mxu0 %v409
    %431 = vmatprep.subr.bf16.mxu0 0
    %432 = vmatpush1.bf16.msra.mxu0 %v408
    %433 = vmatprep.subr.bf16.mxu0 0
    %434 = vmatpush1.bf16.msra.mxu0 %v407
    %435 = vmatprep.subr.bf16.mxu0 0
    %436 = vmatpush2.bf16.msra.mxu0 0
    %437 = vmatprep.subr.bf16.mxu0 0
    %438 = vmatpush2.bf16.msra.mxu0 0
    %439 = vmatprep.subr.bf16.mxu0 0
    %440 = vmatpush2.bf16.msra.mxu0 0
    %441 = vmatprep.subr.bf16.mxu0 0
    %442 = vmatpush2.bf16.msra.mxu0 0
    %443 = vmatprep.subr.bf16.mxu0 0
    %444 = vmatpush2.bf16.msra.mxu0 0
    %445 = vmatprep.subr.bf16.mxu0 0
    %446 = vmatpush2.bf16.msra.mxu0 0
    %447 = vmatprep.subr.bf16.mxu0 0
    %448 = vmatpush2.bf16.msra.mxu0 0
    %449 = vmatprep.subr.bf16.mxu0 0
    %450 = vmatpush2.bf16.msra.mxu0 0
    %451 = vmatprep.mubr.bf16.mxu0 0
    %452 = vmatmul.mubr.bf16.gmra.mxu0 %v417
    %v453 = vpop.f32.mrf.mxu0
    %v454 = vadd.f32 %v390, %v453
    %v455 = vpop.f32.mrf.mxu0
    %v456 = vpop.f32.mrf.mxu0
    %v457 = vpop.f32.mrf.mxu0
    %458 = vdwg.mxu0
    %v459 = vld [vmem:[#allocation2 + $0x30] sm:$0xf]
    %v460 = vld [vmem:[#allocation2 + $0x34] sm:$0xf]
    %v461 = vld [vmem:[%s3 + $0x5] sm:$0x1]
    %v462 = vld [vmem:[%s3 + $0x6] sm:$0x1]
    %v463 = vld [vmem:[%s3 + $0x7] sm:$0x1]
    %v464 = vld [vmem:[#allocation2 + $0x38] sm:$0xf]
    %v465 = vld [vmem:[#allocation2 + $0x3c] sm:$0xf]
    %v466 = vld [vmem:[#allocation2 + $0x40] sm:$0xf]
    %v467 = vld [vmem:[#allocation2 + $0x44] sm:$0xf]
    %v468 = vld [vmem:[#allocation2 + $0x48] sm:$0xf]
    %v469 = vld [vmem:[#allocation2 + $0x4c] sm:$0xf]
    %v470 = vld [vmem:[#allocation2 + $0x50] sm:$0xf]
    %v471 = vld [vmem:[#allocation2 + $0x54] sm:$0xf]
    %v472 = vld [vmem:[%s3 + $0x8] sm:$0x1]
    %v473 = vpack.c.bf16 %v454, %v454
    %v474 = vlaneseq
    %v475 = vshrl.u32 %v474, 7
    %v476 = vsub.s32 0, %v475
    %v477 = vrot.slane %v461, %v476
    %v480 = vunpack.c.l.b16 %v459
    %v481 = vunpack.c.l.b16 %v460
    %v482 = vpack.c.b16 %v481, %v480
    %vm484 = vcmask 130048
    %v486 = vsel %vm484, %v473, 0
    %488 = vmatprep.subr.bf16.mxu0 0
    %489 = vmatpush1.bf16.msra.mxu0 0
    %490 = vmatprep.subr.bf16.mxu0 0
    %491 = vmatpush1.bf16.msra.mxu0 0
    %492 = vmatprep.subr.bf16.mxu0 0
    %493 = vmatpush1.bf16.msra.mxu0 0
    %494 = vmatprep.subr.bf16.mxu0 0
    %495 = vmatpush1.bf16.msra.mxu0 0
    %496 = vmatprep.subr.bf16.mxu0 0
    %497 = vmatpush1.bf16.msra.mxu0 0
    %498 = vmatprep.subr.bf16.mxu0 0
    %499 = vmatpush1.bf16.msra.mxu0 0
    %500 = vmatprep.subr.bf16.mxu0 0
    %501 = vmatpush1.bf16.msra.mxu0 0
    %502 = vmatprep.subr.bf16.mxu0 0
    %503 = vmatpush1.bf16.msra.mxu0 %v482
    %504 = vmatprep.subr.bf16.mxu0 0
    %505 = vmatpush2.bf16.msra.mxu0 0
    %506 = vmatprep.subr.bf16.mxu0 0
    %507 = vmatpush2.bf16.msra.mxu0 0
    %508 = vmatprep.subr.bf16.mxu0 0
    %509 = vmatpush2.bf16.msra.mxu0 0
    %510 = vmatprep.subr.bf16.mxu0 0
    %511 = vmatpush2.bf16.msra.mxu0 0
    %512 = vmatprep.subr.bf16.mxu0 0
    %513 = vmatpush2.bf16.msra.mxu0 0
    %514 = vmatprep.subr.bf16.mxu0 0
    %515 = vmatpush2.bf16.msra.mxu0 0
    %516 = vmatprep.subr.bf16.mxu0 0
    %517 = vmatpush2.bf16.msra.mxu0 0
    %518 = vmatprep.subr.bf16.mxu0 0
    %519 = vmatpush2.bf16.msra.mxu0 0
    %520 = vmatprep.mubr.bf16.mxu0 0
    %521 = vmatmul.mubr.bf16.gmra.mxu0 %v486
    %v522 = vpop.f32.mrf.mxu0
    %v523 = vadd.f32 %v477, %v522
    %v524 = vpop.f32.mrf.mxu0
    %v525 = vpop.f32.mrf.mxu0
    %v526 = vpop.f32.mrf.mxu0
    %527 = vdwg.mxu0
    %v528 = vsel %vm349, %v523, 0.0
    %v529 = vrot.slane %v528, 4
    %v530 = vadd.f32 %v528, %v529
    %v531 = vrot.slane %v530, 2
    %v532 = vadd.f32 %v530, %v531
    %v533 = vrot.slane %v532, 1
    %v534 = vadd.f32 %v532, %v533
    %v535 = vmul.f32 %v534, %v357
    %v536 = vmul.f32 %v523, %v523
    %v537 = vsel %vm349, %v536, 0.0
    %v538 = vrot.slane %v537, 4
    %v539 = vadd.f32 %v537, %v538
    %v540 = vrot.slane %v539, 2
    %v541 = vadd.f32 %v539, %v540
    %v542 = vrot.slane %v541, 1
    %v543 = vadd.f32 %v541, %v542
    %v544 = vmul.f32 %v543, %v357
    %v545 = vmul.f32 %v535, %v535
    %v546 = vsub.f32 %v544, %v545
    %v547 = vmax.f32 %v546, 0.0
    %v548 = vsub.f32 %v523, %v535
    %v549 = vadd.f32 %v547, 1e-05
    %v550 = vrsqrt.pop %v549
    %v551 = vmul.f32 %v548, %v550
    %v552 = vlaneseq
    %v553 = vshrl.u32 %v552, 7
    %v554 = vsub.s32 0, %v553
    %v555 = vrot.slane %v462, %v554
    %v556 = vmul.f32 %v551, %v555
    %v557 = vlaneseq
    %v558 = vshrl.u32 %v557, 7
    %v559 = vsub.s32 0, %v558
    %v560 = vrot.slane %v463, %v559
    %v561 = vadd.f32 %v556, %v560
    %v562 = vmax.f32 %v561, 0.0
    %v563 = vpack.c.bf16 %v562, %v562
    %v564 = vlaneseq
    %v565 = vshrl.u32 %v564, 7
    %v566 = vsub.s32 0, %v565
    %v567 = vrot.slane %v472, %v566
    %v576 = vunpack.c.l.b16 %v464
    %v577 = vunpack.c.l.b16 %v465
    %v578 = vunpack.c.l.b16 %v466
    %v579 = vunpack.c.l.b16 %v467
    %v580 = vunpack.c.l.b16 %v468
    %v581 = vunpack.c.l.b16 %v469
    %v582 = vunpack.c.l.b16 %v470
    %v583 = vunpack.c.l.b16 %v471
    %v584 = vpack.c.b16 %v577, %v576
    %v585 = vpack.c.b16 %v579, %v578
    %v586 = vpack.c.b16 %v581, %v580
    %v587 = vpack.c.b16 %v583, %v582
    %v593 = vsel %vm415, %v563, 0
    %595 = vmatprep.subr.bf16.mxu0 0
    %596 = vmatpush1.bf16.msra.mxu0 0
    %597 = vmatprep.subr.bf16.mxu0 0
    %598 = vmatpush1.bf16.msra.mxu0 0
    %599 = vmatprep.subr.bf16.mxu0 0
    %600 = vmatpush1.bf16.msra.mxu0 0
    %601 = vmatprep.subr.bf16.mxu0 0
    %602 = vmatpush1.bf16.msra.mxu0 0
    %603 = vmatprep.subr.bf16.mxu0 0
    %604 = vmatpush1.bf16.msra.mxu0 %v587
    %605 = vmatprep.subr.bf16.mxu0 0
    %606 = vmatpush1.bf16.msra.mxu0 %v586
    %607 = vmatprep.subr.bf16.mxu0 0
    %608 = vmatpush1.bf16.msra.mxu0 %v585
    %609 = vmatprep.subr.bf16.mxu0 0
    %610 = vmatpush1.bf16.msra.mxu0 %v584
    %611 = vmatprep.subr.bf16.mxu0 0
    %612 = vmatpush2.bf16.msra.mxu0 0
    %613 = vmatprep.subr.bf16.mxu0 0
    %614 = vmatpush2.bf16.msra.mxu0 0
    %615 = vmatprep.subr.bf16.mxu0 0
    %616 = vmatpush2.bf16.msra.mxu0 0
    %617 = vmatprep.subr.bf16.mxu0 0
    %618 = vmatpush2.bf16.msra.mxu0 0
    %619 = vmatprep.subr.bf16.mxu0 0
    %620 = vmatpush2.bf16.msra.mxu0 0
    %621 = vmatprep.subr.bf16.mxu0 0
    %622 = vmatpush2.bf16.msra.mxu0 0
    %623 = vmatprep.subr.bf16.mxu0 0
    %624 = vmatpush2.bf16.msra.mxu0 0
    %625 = vmatprep.subr.bf16.mxu0 0
    %626 = vmatpush2.bf16.msra.mxu0 0
    %627 = vmatprep.mubr.bf16.mxu0 0
    %628 = vmatmul.mubr.bf16.gmra.mxu0 %v593
    %v629 = vpop.f32.mrf.mxu0
    %v630 = vadd.f32 %v567, %v629
    %v631 = vpop.f32.mrf.mxu0
    %v632 = vpop.f32.mrf.mxu0
    %v633 = vpop.f32.mrf.mxu0
    %634 = vdwg.mxu0
    %v635 = vmul.f32 %v630, %v630
    %v636 = vsel %vm349, %v635, 0.0
    %637 = vadd.xlane.f32.xlu0 %v636
    %v638 = vpop.xlane.xlu0 %637
    %v639 = vmul.f32 %v454, %v454
    %v640 = vsel %vm349, %v639, 0.0
    %641 = vadd.xlane.f32.xlu0 %v640
    %v642 = vpop.xlane.xlu0 %641
    %v643 = vmul.f32 %v630, %v454
    %v644 = vsel %vm349, %v643, 0.0
    %645 = vadd.xlane.f32.xlu0 %v644
    %v646 = vpop.xlane.xlu0 %645
    %v647 = vmax.f32 %v638, 1e-24
    %v648 = vmax.f32 %v642, 1e-24
    %v649 = vmul.f32 %v647, %v648
    %v650 = vrsqrt.pop %v649
    %v651 = vmul.f32 %v646, %v650
    %v652 = vmul.f32 %v651, 2.0
    %v653 = vsub.f32 2.0, %v652
    %v654 = vsel %vm349, %v653, 0.0
    %v655 = vrot.slane %v654, 4
    %v656 = vadd.f32 %v654, %v655
    %v657 = vrot.slane %v656, 2
    %v658 = vadd.f32 %v656, %v657
    %v659 = vrot.slane %v658, 1
    %v660 = vadd.f32 %v658, %v659
    %v661 = vmul.f32 %v660, %v357
    %vm662 = vcmask 0
    %663 = vst.msk [vmem:[#allocation5] sm:$0x1] %vm662, %v661
    // Predicated region
    $region22: #{simsiam_forward.1} parent=1 // pred_check
      _
    $region23: #{simsiam_forward.1} parent=1 // pred_check_branch
      %665 = sbr.rel (0) target = $region25
    $region24: #{simsiam_forward.1} parent=1 // pred_region
      %s667 = ssub.s32 16, 16
      %668 = vsyncadd [#allocation4], %s667
      %s670 = sshll.u32 [#allocation5], 4
      %s671 = int_to_ptr.vmem [resolvable:$true] %s670
      %673 = dma.vmem_to_hbm [thread:$0]  %s671, 16, %s4, [#allocation4]
    $region25: #{simsiam_forward.1} parent=1 // pred_fallthru
      _
    // Predicated region
    $region26: #{simsiam_forward.1} parent=1 // pred_check
      _
    $region27: #{simsiam_forward.1} parent=1 // pred_check_branch
      %675 = sbr.rel (0) target = $region29
    $region28: #{simsiam_forward.1} parent=1 // pred_region
      %676 = dma.done [#allocation4], 16
    $region29: #{simsiam_forward.1} parent=1 // pred_fallthru
      _
    %677 = vsyncpa [#allocation3], 1
    %678 = vsyncpa [#allocation4], 1

</llo_original>
